<compile_context>
chip_gen: v7x
topology: tpu7x:2x2x1
jax: 0.10.0
libtpu: 0.0.40
codegen_flags: <defaults>
</compile_context>

<pallas_src>
import math

import jax
import jax.numpy as jnp
from jax.experimental import pallas as pl
from jax.experimental.pallas import tpu as pltpu

_LANE = 128


def _pe_add_kernel(x_ref, pe_ref, o_ref):
    # x_ref / o_ref: (Bt, Ct); pe_ref: (1, Ct) broadcast over the batch tile.
    o_ref[...] = (x_ref[...] + pe_ref[...]).astype(o_ref.dtype)


def make_positional_encoding(length: int, d_model: int = 20) -> jnp.ndarray:
    """sin/cos table identical to the PyTorch buffer `pe` of shape (1, L, D)."""
    position = jnp.arange(length, dtype=jnp.float32)[:, None]             # (L, 1)
    div_term = jnp.exp(
        jnp.arange(0, d_model, 2, dtype=jnp.float32)
        * (-math.log(10000.0) / d_model)
    )                                                                     # (ceil(D/2),)
    angles = position * div_term                                          # (L, ceil(D/2))
    pe = jnp.zeros((length, d_model), dtype=jnp.float32)
    pe = pe.at[:, 0::2].set(jnp.sin(angles))
    pe = pe.at[:, 1::2].set(jnp.cos(angles)[:, : d_model // 2])
    return pe[None, :, :]                                                 # (1, L, D)


def _sublane_multiple(itemsize: int) -> int:
    # Packed sub-32-bit dtypes need larger sublane multiples.
    return {4: 8, 2: 16, 1: 32}.get(itemsize, 8)


def _target_block_bytes() -> int:
    """Per-buffer block-byte target, sized to the default scoped-VMEM limit."""
    try:
        kind = jax.devices()[0].device_kind.lower()
    except Exception:
        return 2 << 20
    # v5e and older: 16 MiB default scoped VMEM -> 2 MiB blocks (12 MiB total).
    for old in ("v2", "v3", "v4", "v5"):
        if old in kind:
            return 2 << 20
    # v6e / v7x: 32 MiB default scoped VMEM -> 4 MiB blocks (24 MiB total).
    return 4 << 20


def _choose_tiles(B: int, N: int, itemsize: int, target_bytes: int):
    """Pick a (Bt, Ct) block for the (B, N) lane-major layout.

    Bt is either == B or a multiple of the dtype sublane; Ct is either == N
    or a multiple of 128 -- so every BlockSpec satisfies the (8, 128) rule.
    """
    sub = _sublane_multiple(itemsize)
    budget = max(target_bytes // itemsize, sub * _LANE)   # elements per block

    min_rows = B if B < sub else sub
    if min_rows * N <= budget:
        # Regime A: full rows fit -> Ct = N, tile (only) over the batch axis.
        Ct = N
        rows = budget // N
        if rows >= B:
            Bt = B
        else:
            Bt = max(sub, (rows // sub) * sub)            # ragged last block is fine
    else:
        # Regime B: tile the flattened feature axis in 128-lane-aligned chunks.
        Bt = B if B < sub else sub
        Ct = max(_LANE, (budget // (Bt * _LANE)) * _LANE)
        Ct = min(Ct, pl.cdiv(N, _LANE) * _LANE)

    # Ensure >= 2 grid steps for non-trivial single-block problems so v7x's
    # second TensorCore gets work (cheap no-op concern on single-TC chips).
    if Bt == B and Ct == N and B * N * itemsize >= (1 << 20):
        if N >= 2 * _LANE:
            Ct = pl.cdiv(pl.cdiv(N, 2), _LANE) * _LANE
        elif B >= 2 * sub:
            Bt = max(sub, (pl.cdiv(B, 2) // sub) * sub)

    return Bt, Ct


def positional_encoding_forward(x: jnp.ndarray, pe: jnp.ndarray) -> jnp.ndarray:
    """x: (B, L, D), pe: (1, L, D) -> (B, L, D). Computes x + pe (batch broadcast)."""
    B, L, D = x.shape
    assert pe.shape == (1, L, D)

    N = L * D
    x2 = x.reshape(B, N)                       # free bitcast of contiguous x
    pe2 = pe.reshape(1, N).astype(x.dtype)     # tiny; cast once so pe streams at x's width

    itemsize = jnp.dtype(x.dtype).itemsize
    Bt, Ct = _choose_tiles(B, N, itemsize, _target_block_bytes())

    # Columns outer, batch inner: pe's block index is constant over the inner
    # axis, so Pallas fetches each pe block from HBM exactly once.
    grid = (pl.cdiv(N, Ct), pl.cdiv(B, Bt))

    out2 = pl.pallas_call(
        _pe_add_kernel,
        out_shape=jax.ShapeDtypeStruct((B, N), x.dtype),
        grid_spec=pltpu.PrefetchScalarGridSpec(
            num_scalar_prefetch=0,
            grid=grid,
            in_specs=[
                pl.BlockSpec((Bt, Ct), lambda c, b: (b, c)),   # x tile
                pl.BlockSpec((1, Ct), lambda c, b: (0, c)),    # pe tile (batch-bcast)
            ],
            out_specs=pl.BlockSpec((Bt, Ct), lambda c, b: (b, c)),
        ),
        compiler_params=pltpu.CompilerParams(
            dimension_semantics=("parallel", "parallel"),
        ),
    )(x2, pe2)

    return out2.reshape(B, L, D)


if __name__ == "__main__":
    # Small shapes consistent with the module: seq len=8, d_model=20, batch=2.
    B, L, D = 2, 8, 20

    key = jax.random.PRNGKey(0)
    x = jax.random.normal(key, (B, L, D), dtype=jnp.float32)

    pe = make_positional_encoding(L, D)

    out = positional_encoding_forward(x, pe)
    out = jax.block_until_ready(out)

    # Sanity check against a plain-JAX reference of the PyTorch forward.
    ref = x + pe
    assert out.shape == (B, L, D)
    assert jnp.allclose(out, ref, atol=1e-6, rtol=1e-6)

    print("KERNEL_OK")
</pallas_src>

<mosaic_0001>
module attributes {stable_mosaic.version = 11 : i64} {
  func.func @_pe_add_kernel(%arg0: i32, %arg1: i32, %arg2: memref<2x160xf32, #tpu.memory_space<vmem>>, %arg3: memref<1x160xf32, #tpu.memory_space<vmem>>, %arg4: memref<2x160xf32, #tpu.memory_space<vmem>>) attributes {dimension_semantics = [#tpu.dimension_semantics<parallel>, #tpu.dimension_semantics<parallel>], iteration_bounds = array<i64: 1, 1>, scalar_prefetch = 0 : i64, scratch_operands = 0 : i64, tpu.core_type = #tpu.core_type<tc>, window_params = [{transform_indices = @transform_0, window_bounds = array<i64: 2, 160>}, {transform_indices = @transform_1, window_bounds = array<i64: 1, 160>}, {transform_indices = @transform_2, window_bounds = array<i64: 2, 160>}]} {
    %c0 = arith.constant 0 : index
    %c0_0 = arith.constant 0 : index
    %0 = vector.load %arg2[%c0, %c0_0] : memref<2x160xf32, #tpu.memory_space<vmem>>, vector<2x160xf32>
    %c0_1 = arith.constant 0 : index
    %c0_2 = arith.constant 0 : index
    %1 = vector.load %arg3[%c0_1, %c0_2] : memref<1x160xf32, #tpu.memory_space<vmem>>, vector<1x160xf32>
    %2 = vector.broadcast %1 : vector<1x160xf32> to vector<2x160xf32>
    %3 = arith.addf %0, %2 : vector<2x160xf32>
    %c0_3 = arith.constant 0 : index
    %c0_4 = arith.constant 0 : index
    %4 = vector.load %arg4[%c0_3, %c0_4] : memref<2x160xf32, #tpu.memory_space<vmem>>, vector<2x160xf32>
    tpu.vector_store %arg4[%c0_3, %c0_4], %3 {strides = array<i32>} : memref<2x160xf32, #tpu.memory_space<vmem>>, vector<2x160xf32>,
    return
  }
  func.func @transform_0(%arg0: i32, %arg1: i32) -> (i32, i32) {
    %c0_i32 = arith.constant 0 : i32
    return %arg1, %arg0 : i32, i32
  }
  func.func @transform_1(%arg0: i32, %arg1: i32) -> (i32, i32) {
    %c0_i32 = arith.constant 0 : i32
    %c0_i32_0 = arith.constant 0 : i32
    return %c0_i32, %arg0 : i32, i32
  }
  func.func @transform_2(%arg0: i32, %arg1: i32) -> (i32, i32) {
    %c0_i32 = arith.constant 0 : i32
    return %arg1, %arg0 : i32, i32
  }
}

</mosaic_0001>

<llo_original>
// kernel: tpu_custom_call.1
$region0: #{tpu_custom_call.1}
  #allocation0 [shape = 'u32[]', space=smem, size = 0x4, offset = 0x4, fixed_abs, tag = 'smem constant byte address 0x4 - core index']
  #allocation1 [shape = 'u32[144,128]{1,0:T(1,128)}', space=vmem, size = 0x12000, scoped, tag = 'internal scratch']
  %s0 = inlined_call_operand.hbm [shape: f32[2,160], index: 0, kind: input, shape index: {}]
  %s1 = inlined_call_operand.vmem [shape: f32[1,160], index: 1, kind: input, shape index: {}]
  %s2 = inlined_call_operand.hbm [shape: f32[2,160], index: 2, kind: output, shape index: {}]
  %s3 = sld [smem:[#allocation0]]
  $region22: #{tpu_custom_call.1} parent=0
    _
  %s5 = ssub.s32 1, %s3
  %s6 = scalar_select 0, %s5, %s3
  $region1: #{tpu_custom_call.1} parent=0
    #allocation2 [shape = 'u8[2048]{0}', space=vmem, size = 0x800, scoped, tag = 'input window, operand 0, single buffered']
    #allocation3 [shape = 's32[1]{0}', space=sflag, size = 0x4, scoped, tag = 'scoped memory for tpu_custom_call.1']
    #allocation4 [shape = 's32[1]{0}', space=sflag, size = 0x4, scoped, tag = 'scoped memory for tpu_custom_call.1']
    #allocation5 [shape = 'u8[2048]{0}', space=vmem, size = 0x800, scoped, tag = 'output window, operand 0, single buffered']
    %7 = vsyncpa [#allocation3], 0
    %8 = vsyncpa [#allocation4], 0
    // Predicated region
    $region2: #{tpu_custom_call.1} parent=1 // pred_check
      _
    $region3: #{tpu_custom_call.1} parent=1 // pred_check_branch
      %10 = sbr.rel (0) target = $region5
    $region4: #{tpu_custom_call.1} parent=1 // pred_region
      %s12 = ssub.s32 64, 64
      %13 = vsyncadd [#allocation3], %s12
      %s15 = sshll.u32 [#allocation2], 4
      %s16 = int_to_ptr.vmem [resolvable:$true] %s15
      %18 = dma.hbm_to_vmem [thread:$0]  %s0, 64, %s16, [#allocation3]
    $region5: #{tpu_custom_call.1} parent=1 // pred_fallthru
      _
    // Predicated region
    $region6: #{tpu_custom_call.1} parent=1 // pred_check
      _
    $region7: #{tpu_custom_call.1} parent=1 // pred_check_branch
      %20 = sbr.rel (0) target = $region9
    $region8: #{tpu_custom_call.1} parent=1 // pred_region
      _
    $region9: #{tpu_custom_call.1} parent=1 // pred_fallthru
      _
    // Predicated region
    $region10: #{tpu_custom_call.1} parent=1 // pred_check
      _
    $region11: #{tpu_custom_call.1} parent=1 // pred_check_branch
      %22 = sbr.rel (0) target = $region13
    $region12: #{tpu_custom_call.1} parent=1 // pred_region
      %23 = dma.done [#allocation3], 64
    $region13: #{tpu_custom_call.1} parent=1 // pred_fallthru
      _
    %v24 = vld [vmem:[#allocation2] sm:$0xf]
    %v25 = vld [vmem:[%s1] sm:$0x3]
    %v27 = vlaneseq
    %v28 = vshrl.u32 %v27, 7
    %v29 = vsub.s32 0, %v28
    %v30 = vrot.slane %v25, %v29
    %v31 = vlaneseq
    %v32 = vshrl.u32 %v31, 7
    %v33 = vsub.s32 1, %v32
    %v34 = vrot.slane %v25, %v33
    %v35 = vcombine.low %v30, %v34
    %v37 = vunpack.c.l.s4 1983009808
    %v38 = vunpack.c.0.s8 %v37
    %v39 = vlaneseq
    %v40 = vshrl.u32 %v39, 7
    %v41 = vsub.s32 %v38, %v40
    %v42 = vrot.slane %v35, %v41
    %v44 = vadd.f32 %v24, %v42
    %vm45 = vcmask 1041408
    %vm46 = vcmask 257026
    %vm47 = vmor %vm46, %vm45
    %48 = vst.msk [vmem:[#allocation5] sm:$0xf] %vm47, %v44
    // Predicated region
    $region14: #{tpu_custom_call.1} parent=1 // pred_check
      _
    $region15: #{tpu_custom_call.1} parent=1 // pred_check_branch
      %50 = sbr.rel (0) target = $region17
    $region16: #{tpu_custom_call.1} parent=1 // pred_region
      %s52 = ssub.s32 64, 64
      %53 = vsyncadd [#allocation4], %s52
      %s55 = sshll.u32 [#allocation5], 4
      %s56 = int_to_ptr.vmem [resolvable:$true] %s55
      %58 = dma.vmem_to_hbm [thread:$0]  %s56, 64, %s2, [#allocation4]
    $region17: #{tpu_custom_call.1} parent=1 // pred_fallthru
      _
    // Predicated region
    $region18: #{tpu_custom_call.1} parent=1 // pred_check
      _
    $region19: #{tpu_custom_call.1} parent=1 // pred_check_branch
      %60 = sbr.rel (0) target = $region21
    $region20: #{tpu_custom_call.1} parent=1 // pred_region
      %61 = dma.done [#allocation4], 64
    $region21: #{tpu_custom_call.1} parent=1 // pred_fallthru
      _
    %62 = vsyncpa [#allocation3], 1
    %63 = vsyncpa [#allocation4], 1

</llo_original>
